<compile_context>
chip_gen: v7x
topology: tpu7x:2x2x1
jax: 0.10.0
libtpu: 0.0.40
codegen_flags: <defaults>
</compile_context>

<pallas_src>
import functools

import jax
import jax.numpy as jnp
from jax import lax
from jax.experimental import pallas as pl
from jax.experimental.pallas import tpu as pltpu


def _round_up(x, m):
    return ((x + m - 1) // m) * m


# ----------------------------------------------------------------------------
# Fused kernel: grid axis 0 iterates over batches of Lb SVD layers.
# Step i writes its own (1,1) partial loss; step 0 additionally computes CE.
# ----------------------------------------------------------------------------
def _fused_loss_kernel(rs_ref,       # SMEM [NB*Lb] int32 (scalar prefetch: rank per layer, 0 = dummy)
                       logits_ref,   # VMEM [B, K_pad]     (resident across the grid)
                       tgt_ref,      # VMEM [B, 1] int32   (resident)
                       nt_ref,       # VMEM [Lb, r_pad, M_pad]   = N^T, zero padded
                       c_ref,        # VMEM [Lb, r_pad, Nc_pad]  = C,   zero padded
                       out_ref,      # VMEM [1, 1] f32 partial loss for this step
                       *, lam, inv_batch, const0, lb):
    i = pl.program_id(0)
    r_pad = nt_ref.shape[1]

    # Diagonal mask for trace(G); hoisted out of the Lb loop (static shape).
    rows = lax.broadcasted_iota(jnp.int32, (r_pad, r_pad), 0)
    cols = lax.broadcasted_iota(jnp.int32, (r_pad, r_pad), 1)
    diag = jnp.where(rows == cols, 1.0, 0.0).astype(jnp.float32)

    # ----- orthogonality terms for the Lb layers of this step -----
    # mse(G, I_r) = (||G||_F^2 - 2*trace(G) + r) / r^2 ; the padded rows/cols of
    # G are exactly zero (zero-padded factors), and the static "+r/r^2" parts
    # are folded into `const0` (added once at step 0 below).
    orth = jnp.zeros((1, 1), jnp.float32)
    for j in range(lb):                              # static unroll over the layer batch
        nt = nt_ref[j]                               # [r_pad, M_pad]  (N^T, lane-dense)
        c = c_ref[j]                                 # [r_pad, Nc_pad]
        # N^T N == nt @ nt^T ; C C^T == c @ c^T : contract over the last (lane) dim.
        gn = lax.dot_general(nt, nt, (((1,), (1,)), ((), ())),
                             preferred_element_type=jnp.float32)   # [r_pad, r_pad]
        gc = lax.dot_general(c, c, (((1,), (1,)), ((), ())),
                             preferred_element_type=jnp.float32)   # [r_pad, r_pad]
        frob = jnp.sum(gn * gn, keepdims=True) + jnp.sum(gc * gc, keepdims=True)
        tr = jnp.sum(gn * diag, keepdims=True) + jnp.sum(gc * diag, keepdims=True)

        r = rs_ref[i * lb + j]                       # true rank (0 for dummy pad layers)
        r_f = jnp.maximum(r, 1).astype(jnp.float32)
        w = 1.0 / (r_f * r_f)                        # mse denominator; dummy layers have frob=tr=0
        orth = orth + w * (frob - 2.0 * tr)

    lam_f = jnp.float32(lam)

    @pl.when(i == 0)
    def _first_step():
        # ----- cross-entropy with mean reduction (F.cross_entropy) -----
        # f32 only for stable exp/log; padded classes hold -1e30 -> exp == 0.
        logits = logits_ref[...].astype(jnp.float32)            # [B, K_pad]
        m = jnp.max(logits, axis=-1, keepdims=True)
        shifted = logits - m
        sumexp = jnp.sum(jnp.exp(shifted), axis=-1, keepdims=True)
        cls = lax.broadcasted_iota(jnp.int32, logits.shape, 1)
        picked = jnp.sum(jnp.where(cls == tgt_ref[...], shifted, 0.0),
                         axis=-1, keepdims=True)                # masked target pick
        ce = jnp.sum(jnp.log(sumexp) - picked,
                     keepdims=True) * jnp.float32(inv_batch)    # (1, 1)
        out_ref[...] = ce + lam_f * (orth + jnp.float32(const0))

    @pl.when(i > 0)
    def _other_steps():
        out_ref[...] = lam_f * orth


# ----------------------------------------------------------------------------
# One-time packing of the SVD factors (reuse the result across training steps).
# ----------------------------------------------------------------------------
def pack_svd_layers(svd_layers, *, max_layers_per_step=8,
                    vmem_budget_bytes=40 * 2 ** 20):
    """svd_layers: list of dicts with keys 'N' [M, r], 'C' [r, Nc], 'Sigma' [r]."""
    if svd_layers:
        dt = jnp.result_type(*([l["N"].dtype for l in svd_layers]
                               + [l["C"].dtype for l in svd_layers]))
    else:
        dt = jnp.float32
    itemsize = jnp.dtype(dt).itemsize
    pack = max(8, 32 // itemsize)            # sublane pack: f32->8, bf16->16, int8->32

    rs = [int(l["N"].shape[1]) for l in svd_layers]
    ms = [int(l["N"].shape[0]) for l in svd_layers]
    ncs = [int(l["C"].shape[1]) for l in svd_layers]
    num_layers = max(len(svd_layers), 1)

    r_pad = max(pack, _round_up(max(rs, default=1), pack))
    m_pad = max(128, _round_up(max(ms, default=1), 128))
    nc_pad = max(128, _round_up(max(ncs, default=1), 128))

    bytes_per_layer = r_pad * (m_pad + nc_pad) * itemsize
    lb_fit = max(1, vmem_budget_bytes // (2 * bytes_per_layer))   # x2: double-buffered blocks
    lb = int(min(num_layers, lb_fit, max_layers_per_step))
    nb = -(-num_layers // lb)
    l_total = nb * lb

    # jnp.pad per layer + one jnp.stack (single concat) instead of an L-long
    # .at[idx].set() chain over the full padded stack.
    nt_list, c_list, r_list = [], [], []
    for layer in svd_layers:
        n = jnp.asarray(layer["N"], dt)              # [M, r]
        c = jnp.asarray(layer["C"], dt)              # [r, Nc]
        m, r = n.shape
        nc = c.shape[1]
        nt_list.append(jnp.pad(n.T, ((0, r_pad - r), (0, m_pad - m))))
        c_list.append(jnp.pad(c, ((0, r_pad - r), (0, nc_pad - nc))))
        r_list.append(r)
    while len(nt_list) < l_total:                    # dummy layers to fill the last batch
        nt_list.append(jnp.zeros((r_pad, m_pad), dt))
        c_list.append(jnp.zeros((r_pad, nc_pad), dt))
        r_list.append(0)

    return dict(
        nt=jnp.stack(nt_list),                       # [NB*Lb, r_pad, M_pad]
        c=jnp.stack(c_list),                         # [NB*Lb, r_pad, Nc_pad]
        rs=jnp.asarray(r_list, jnp.int32),           # [NB*Lb]
        const0=float(sum(2.0 / r for r in rs if r > 0)),   # static "+r/r^2" mse terms (N and C)
        lb=lb, nb=nb, r_pad=r_pad, m_pad=m_pad, nc_pad=nc_pad,
        bytes_per_layer=bytes_per_layer, dtype=dt)


# ----------------------------------------------------------------------------
# Module-equivalent wrapper.
# ----------------------------------------------------------------------------
def regularized_loss_svd_conv(output, target, svd_layers=None, *, packed=None,
                              lambda_orth=1e-4, allow_svd_values_negative=False):
    # Sigma.abs() is computed in the torch forward but never used in the loss.
    del allow_svd_values_negative
    if packed is None:
        packed = pack_svd_layers(svd_layers if svd_layers is not None else [])

    output = jnp.asarray(output)
    B, K = output.shape
    tgt = jnp.asarray(target).reshape(B, 1).astype(jnp.int32)

    # Lane-dense CE block: pad the class dim to a 128 multiple with a very
    # negative value (exp underflows to 0, max / target pick unaffected).
    k_pad = max(128, _round_up(K, 128))
    if k_pad != K:
        output = jnp.pad(output, ((0, 0), (0, k_pad - K)), constant_values=-1e30)

    lb, nb = packed["lb"], packed["nb"]
    r_pad, m_pad, nc_pad = packed["r_pad"], packed["m_pad"], packed["nc_pad"]

    # Explicit VMEM budget (v7x physical VMEM is 64 MiB): double-buffered
    # factor blocks + resident logits + Gram tiles, with headroom.
    need = (2 * lb * packed["bytes_per_layer"]
            + 2 * B * k_pad * output.dtype.itemsize
            + 4 * r_pad * r_pad * 4 + (1 << 20))
    vmem_limit = int(min(48 * 2 ** 20, max(32 * 2 ** 20, 2 * need)))

    kernel = functools.partial(_fused_loss_kernel,
                               lam=float(lambda_orth),
                               inv_batch=1.0 / float(B),
                               const0=packed["const0"],
                               lb=lb)

    partials = pl.pallas_call(
        kernel,
        out_shape=jax.ShapeDtypeStruct((nb, 1), jnp.float32),
        grid_spec=pltpu.PrefetchScalarGridSpec(
            num_scalar_prefetch=1,
            grid=(nb,),
            in_specs=[
                pl.BlockSpec((B, k_pad), lambda i, rs_s: (0, 0)),          # logits: resident
                pl.BlockSpec((B, 1), lambda i, rs_s: (0, 0)),              # targets: resident
                pl.BlockSpec((lb, r_pad, m_pad), lambda i, rs_s: (i, 0, 0)),
                pl.BlockSpec((lb, r_pad, nc_pad), lambda i, rs_s: (i, 0, 0)),
            ],
            out_specs=pl.BlockSpec((1, 1), lambda i, rs_s: (i, 0)),        # per-step partial
        ),
        compiler_params=pltpu.CompilerParams(
            # No carried state across the layer-batch axis -> parallel (2 TCs on v7x).
            dimension_semantics=("parallel",),
            vmem_limit_bytes=vmem_limit),
    )(packed["rs"], output, tgt, packed["nt"], packed["c"])

    # nb is tiny (= num_layers / Lb); reducing the per-step partials here keeps
    # the kernel's layer axis parallelizable.
    return jnp.sum(partials)


# ----------------------------------------------------------------------------
# Pure-JAX reference for a sanity check.
# ----------------------------------------------------------------------------
def _reference(output, target, svd_layers, lambda_orth):
    logits = output.astype(jnp.float32)
    lse = jax.scipy.special.logsumexp(logits, axis=-1)
    picked = jnp.take_along_axis(logits, target[:, None], axis=-1)[:, 0]
    primary = jnp.mean(lse - picked)
    orth = 0.0
    for layer in svd_layers:
        n = layer["N"].astype(jnp.float32)
        c = layer["C"].astype(jnp.float32)
        r = n.shape[1]
        eye = jnp.eye(r, dtype=jnp.float32)
        orth = orth + jnp.mean((n.T @ n - eye) ** 2) + jnp.mean((c @ c.T - eye) ** 2)
    return primary + lambda_orth * orth


if __name__ == "__main__":
    key = jax.random.PRNGKey(0)
    k_out, k_tgt, k_n1, k_c1, k_s1, k_n2, k_c2, k_s2 = jax.random.split(key, 8)

    B, K = 8, 16                      # batch, num classes (logits layout [B, K])
    lambda_orth = 1e-4

    output = jax.random.normal(k_out, (B, K), dtype=jnp.float32)
    target = jax.random.randint(k_tgt, (B,), 0, K, dtype=jnp.int32)

    # Two synthetic SVD layers (shapes as implied by N^T N -> [r, r], C C^T -> [r, r]).
    svd_layers = [
        {
            "N": jax.random.normal(k_n1, (64, 16), dtype=jnp.float32) * 0.1,
            "C": jax.random.normal(k_c1, (16, 32), dtype=jnp.float32) * 0.1,
            "Sigma": jax.random.normal(k_s1, (16,), dtype=jnp.float32),
        },
        {
            "N": jax.random.normal(k_n2, (32, 8), dtype=jnp.float32) * 0.1,
            "C": jax.random.normal(k_c2, (8, 48), dtype=jnp.float32) * 0.1,
            "Sigma": jax.random.normal(k_s2, (8,), dtype=jnp.float32),
        },
    ]

    # Pack once (padded stacks are reusable across training steps), then run.
    packed = pack_svd_layers(svd_layers)
    total = regularized_loss_svd_conv(output, target, packed=packed,
                                      lambda_orth=lambda_orth)
    total = jax.block_until_ready(total)

    ref = _reference(output, target, svd_layers, lambda_orth)
    assert jnp.allclose(total, ref, rtol=1e-5, atol=1e-5), (total, ref)

    print("KERNEL_OK")
</pallas_src>

<mosaic_0001>
module attributes {stable_mosaic.version = 11 : i64} {
  func.func @_fused_loss_kernel(%arg0: i32, %arg1: memref<2xi32, #tpu.memory_space<smem>>, %arg2: memref<8x128xf32, #tpu.memory_space<vmem>>, %arg3: memref<8x1xi32, #tpu.memory_space<vmem>>, %arg4: memref<2x16x128xf32, #tpu.memory_space<vmem>>, %arg5: memref<2x16x128xf32, #tpu.memory_space<vmem>>, %arg6: memref<1x1xf32, #tpu.memory_space<vmem>>) attributes {dimension_semantics = [#tpu.dimension_semantics<parallel>], iteration_bounds = array<i64: 1>, scalar_prefetch = 1 : i64, scratch_operands = 0 : i64, tpu.core_type = #tpu.core_type<tc>, window_params = [{pipeline_mode = #tpu.pipeline_mode<synchronous>, transform_indices = @transform_0, window_bounds = array<i64: 8, 128>}, {pipeline_mode = #tpu.pipeline_mode<synchronous>, transform_indices = @transform_1, window_bounds = array<i64: 8, 1>}, {transform_indices = @transform_2, window_bounds = array<i64: 2, 16, 128>}, {transform_indices = @transform_3, window_bounds = array<i64: 2, 16, 128>}, {transform_indices = @transform_4, window_bounds = array<i64: 1, 1>}]} {
    %0 = tpu.iota {dimensions = array<i32: 0>} : vector<16x16xi32>
    %1 = tpu.iota {dimensions = array<i32: 1>} : vector<16x16xi32>
    %2 = arith.cmpi eq, %0, %1 : vector<16x16xi32>
    %cst = arith.constant 1.000000e+00 : f32
    %cst_0 = arith.constant 0.000000e+00 : f32
    %3 = vector.broadcast %cst : f32 to vector<16x16xf32>
    %4 = vector.broadcast %cst_0 : f32 to vector<16x16xf32>
    %5 = arith.select %2, %3, %4 : vector<16x16xi1>, vector<16x16xf32>
    %cst_1 = arith.constant 0.000000e+00 : f32
    %6 = vector.broadcast %cst_1 : f32 to vector<1x1xf32>
    %c0 = arith.constant 0 : index
    %c0_2 = arith.constant 0 : index
    %c0_3 = arith.constant 0 : index
    %7 = vector.load %arg4[%c0, %c0_2, %c0_3] : memref<2x16x128xf32, #tpu.memory_space<vmem>>, vector<1x16x128xf32>
    %8 = vector.shape_cast %7 : vector<1x16x128xf32> to vector<16x128xf32>
    %c0_4 = arith.constant 0 : index
    %c0_5 = arith.constant 0 : index
    %c0_6 = arith.constant 0 : index
    %9 = vector.load %arg5[%c0_4, %c0_5, %c0_6] : memref<2x16x128xf32, #tpu.memory_space<vmem>>, vector<1x16x128xf32>
    %10 = vector.shape_cast %9 : vector<1x16x128xf32> to vector<16x128xf32>
    %cst_7 = arith.constant dense<0.000000e+00> : vector<16x16xf32>
    %11 = tpu.matmul %8, %8, %cst_7 {dimension_numbers = #tpu.dot_dimension_numbers<[1], [1], [0], [0], [0, 0, 1, 0], [], []>} : vector<16x128xf32>, vector<16x128xf32>, vector<16x16xf32> -> vector<16x16xf32>
    %cst_8 = arith.constant dense<0.000000e+00> : vector<16x16xf32>
    %12 = tpu.matmul %10, %10, %cst_8 {dimension_numbers = #tpu.dot_dimension_numbers<[1], [1], [0], [0], [0, 0, 1, 0], [], []>} : vector<16x128xf32>, vector<16x128xf32>, vector<16x16xf32> -> vector<16x16xf32>
    %13 = arith.mulf %11, %11 : vector<16x16xf32>
    %14 = vector.shape_cast %13 : vector<16x16xf32> to vector<1x16x16xf32>
    %cst_9 = arith.constant dense<0.000000e+00> : vector<1xf32>
    %15 = vector.multi_reduction <add>, %14, %cst_9 [1, 2] : vector<1x16x16xf32> to vector<1xf32>
    %16 = vector.shape_cast %15 : vector<1xf32> to vector<1x1x1xf32>
    %17 = vector.extract %16[0, 0, 0] : f32 from vector<1x1x1xf32>
    %18 = vector.broadcast %17 : f32 to vector<1x1xf32>
    %19 = arith.mulf %12, %12 : vector<16x16xf32>
    %20 = vector.shape_cast %19 : vector<16x16xf32> to vector<1x16x16xf32>
    %cst_10 = arith.constant dense<0.000000e+00> : vector<1xf32>
    %21 = vector.multi_reduction <add>, %20, %cst_10 [1, 2] : vector<1x16x16xf32> to vector<1xf32>
    %22 = vector.shape_cast %21 : vector<1xf32> to vector<1x1x1xf32>
    %23 = vector.extract %22[0, 0, 0] : f32 from vector<1x1x1xf32>
    %24 = vector.broadcast %23 : f32 to vector<1x1xf32>
    %25 = arith.addf %18, %24 : vector<1x1xf32>
    %26 = arith.mulf %11, %5 : vector<16x16xf32>
    %27 = vector.shape_cast %26 : vector<16x16xf32> to vector<1x16x16xf32>
    %cst_11 = arith.constant dense<0.000000e+00> : vector<1xf32>
    %28 = vector.multi_reduction <add>, %27, %cst_11 [1, 2] : vector<1x16x16xf32> to vector<1xf32>
    %29 = vector.shape_cast %28 : vector<1xf32> to vector<1x1x1xf32>
    %30 = vector.extract %29[0, 0, 0] : f32 from vector<1x1x1xf32>
    %31 = vector.broadcast %30 : f32 to vector<1x1xf32>
    %32 = arith.mulf %12, %5 : vector<16x16xf32>
    %33 = vector.shape_cast %32 : vector<16x16xf32> to vector<1x16x16xf32>
    %cst_12 = arith.constant dense<0.000000e+00> : vector<1xf32>
    %34 = vector.multi_reduction <add>, %33, %cst_12 [1, 2] : vector<1x16x16xf32> to vector<1xf32>
    %35 = vector.shape_cast %34 : vector<1xf32> to vector<1x1x1xf32>
    %36 = vector.extract %35[0, 0, 0] : f32 from vector<1x1x1xf32>
    %37 = vector.broadcast %36 : f32 to vector<1x1xf32>
    %38 = arith.addf %31, %37 : vector<1x1xf32>
    %c2_i32 = arith.constant 2 : i32
    %39 = arith.muli %arg0, %c2_i32 : i32
    %c0_i32 = arith.constant 0 : i32
    %40 = arith.addi %39, %c0_i32 : i32
    %41 = arith.index_cast %40 : i32 to index
    %42 = memref.load %arg1[%41] : memref<2xi32, #tpu.memory_space<smem>>
    %c1_i32 = arith.constant 1 : i32
    %43 = arith.maxsi %42, %c1_i32 : i32
    %44 = arith.sitofp %43 : i32 to f32
    %45 = arith.mulf %44, %44 : f32
    %cst_13 = arith.constant 1.000000e+00 : f32
    %46 = arith.divf %cst_13, %45 : f32
    %cst_14 = arith.constant 2.000000e+00 : f32
    %47 = vector.broadcast %cst_14 : f32 to vector<1x1xf32>
    %48 = arith.mulf %47, %38 : vector<1x1xf32>
    %49 = arith.subf %25, %48 : vector<1x1xf32>
    %50 = vector.broadcast %46 : f32 to vector<1x1xf32>
    %51 = arith.mulf %50, %49 : vector<1x1xf32>
    %52 = arith.addf %6, %51 : vector<1x1xf32>
    %c1 = arith.constant 1 : index
    %c0_15 = arith.constant 0 : index
    %c0_16 = arith.constant 0 : index
    %53 = vector.load %arg4[%c1, %c0_15, %c0_16] : memref<2x16x128xf32, #tpu.memory_space<vmem>>, vector<1x16x128xf32>
    %54 = vector.shape_cast %53 : vector<1x16x128xf32> to vector<16x128xf32>
    %c1_17 = arith.constant 1 : index
    %c0_18 = arith.constant 0 : index
    %c0_19 = arith.constant 0 : index
    %55 = vector.load %arg5[%c1_17, %c0_18, %c0_19] : memref<2x16x128xf32, #tpu.memory_space<vmem>>, vector<1x16x128xf32>
    %56 = vector.shape_cast %55 : vector<1x16x128xf32> to vector<16x128xf32>
    %cst_20 = arith.constant dense<0.000000e+00> : vector<16x16xf32>
    %57 = tpu.matmul %54, %54, %cst_20 {dimension_numbers = #tpu.dot_dimension_numbers<[1], [1], [0], [0], [0, 0, 1, 0], [], []>} : vector<16x128xf32>, vector<16x128xf32>, vector<16x16xf32> -> vector<16x16xf32>
    %cst_21 = arith.constant dense<0.000000e+00> : vector<16x16xf32>
    %58 = tpu.matmul %56, %56, %cst_21 {dimension_numbers = #tpu.dot_dimension_numbers<[1], [1], [0], [0], [0, 0, 1, 0], [], []>} : vector<16x128xf32>, vector<16x128xf32>, vector<16x16xf32> -> vector<16x16xf32>
    %59 = arith.mulf %57, %57 : vector<16x16xf32>
    %60 = vector.shape_cast %59 : vector<16x16xf32> to vector<1x16x16xf32>
    %cst_22 = arith.constant dense<0.000000e+00> : vector<1xf32>
    %61 = vector.multi_reduction <add>, %60, %cst_22 [1, 2] : vector<1x16x16xf32> to vector<1xf32>
    %62 = vector.shape_cast %61 : vector<1xf32> to vector<1x1x1xf32>
    %63 = vector.extract %62[0, 0, 0] : f32 from vector<1x1x1xf32>
    %64 = vector.broadcast %63 : f32 to vector<1x1xf32>
    %65 = arith.mulf %58, %58 : vector<16x16xf32>
    %66 = vector.shape_cast %65 : vector<16x16xf32> to vector<1x16x16xf32>
    %cst_23 = arith.constant dense<0.000000e+00> : vector<1xf32>
    %67 = vector.multi_reduction <add>, %66, %cst_23 [1, 2] : vector<1x16x16xf32> to vector<1xf32>
    %68 = vector.shape_cast %67 : vector<1xf32> to vector<1x1x1xf32>
    %69 = vector.extract %68[0, 0, 0] : f32 from vector<1x1x1xf32>
    %70 = vector.broadcast %69 : f32 to vector<1x1xf32>
    %71 = arith.addf %64, %70 : vector<1x1xf32>
    %72 = arith.mulf %57, %5 : vector<16x16xf32>
    %73 = vector.shape_cast %72 : vector<16x16xf32> to vector<1x16x16xf32>
    %cst_24 = arith.constant dense<0.000000e+00> : vector<1xf32>
    %74 = vector.multi_reduction <add>, %73, %cst_24 [1, 2] : vector<1x16x16xf32> to vector<1xf32>
    %75 = vector.shape_cast %74 : vector<1xf32> to vector<1x1x1xf32>
    %76 = vector.extract %75[0, 0, 0] : f32 from vector<1x1x1xf32>
    %77 = vector.broadcast %76 : f32 to vector<1x1xf32>
    %78 = arith.mulf %58, %5 : vector<16x16xf32>
    %79 = vector.shape_cast %78 : vector<16x16xf32> to vector<1x16x16xf32>
    %cst_25 = arith.constant dense<0.000000e+00> : vector<1xf32>
    %80 = vector.multi_reduction <add>, %79, %cst_25 [1, 2] : vector<1x16x16xf32> to vector<1xf32>
    %81 = vector.shape_cast %80 : vector<1xf32> to vector<1x1x1xf32>
    %82 = vector.extract %81[0, 0, 0] : f32 from vector<1x1x1xf32>
    %83 = vector.broadcast %82 : f32 to vector<1x1xf32>
    %84 = arith.addf %77, %83 : vector<1x1xf32>
    %c2_i32_26 = arith.constant 2 : i32
    %85 = arith.muli %arg0, %c2_i32_26 : i32
    %c1_i32_27 = arith.constant 1 : i32
    %86 = arith.addi %85, %c1_i32_27 : i32
    %87 = arith.index_cast %86 : i32 to index
    %88 = memref.load %arg1[%87] : memref<2xi32, #tpu.memory_space<smem>>
    %c1_i32_28 = arith.constant 1 : i32
    %89 = arith.maxsi %88, %c1_i32_28 : i32
    %90 = arith.sitofp %89 : i32 to f32
    %91 = arith.mulf %90, %90 : f32
    %cst_29 = arith.constant 1.000000e+00 : f32
    %92 = arith.divf %cst_29, %91 : f32
    %cst_30 = arith.constant 2.000000e+00 : f32
    %93 = vector.broadcast %cst_30 : f32 to vector<1x1xf32>
    %94 = arith.mulf %93, %84 : vector<1x1xf32>
    %95 = arith.subf %71, %94 : vector<1x1xf32>
    %96 = vector.broadcast %92 : f32 to vector<1x1xf32>
    %97 = arith.mulf %96, %95 : vector<1x1xf32>
    %98 = arith.addf %52, %97 : vector<1x1xf32>
    %c0_i32_31 = arith.constant 0 : i32
    %99 = arith.cmpi eq, %arg0, %c0_i32_31 : i32
    %100 = arith.extui %99 : i1 to i32
    %cst_32 = arith.constant 9.99999974E-5 : f32
    %c0_i32_33 = arith.constant 0 : i32
    %101 = arith.cmpi ne, %100, %c0_i32_33 : i32
    scf.if %101 {
      %c0_37 = arith.constant 0 : index
      %c0_38 = arith.constant 0 : index
      %105 = vector.load %arg2[%c0_37, %c0_38] : memref<8x128xf32, #tpu.memory_space<vmem>>, vector<8x128xf32>
      %cst_39 = arith.constant dense<0xFF800000> : vector<8xf32>
      %106 = vector.multi_reduction <maximumf>, %105, %cst_39 [1] : vector<8x128xf32> to vector<8xf32>
      %107 = vector.shape_cast %106 : vector<8xf32> to vector<8x1xf32>
      %108 = vector.broadcast %107 : vector<8x1xf32> to vector<8x128xf32>
      %109 = arith.subf %105, %108 : vector<8x128xf32>
      %110 = math.exp %109 : vector<8x128xf32>
      %cst_40 = arith.constant dense<0.000000e+00> : vector<8xf32>
      %111 = vector.multi_reduction <add>, %110, %cst_40 [1] : vector<8x128xf32> to vector<8xf32>
      %112 = vector.shape_cast %111 : vector<8xf32> to vector<8x1xf32>
      %113 = tpu.iota {dimensions = array<i32: 1>} : vector<8x128xi32>
      %c0_41 = arith.constant 0 : index
      %c0_42 = arith.constant 0 : index
      %114 = vector.load %arg3[%c0_41, %c0_42] : memref<8x1xi32, #tpu.memory_space<vmem>>, vector<8x1xi32>
      %115 = vector.broadcast %114 : vector<8x1xi32> to vector<8x128xi32>
      %116 = arith.cmpi eq, %113, %115 : vector<8x128xi32>
      %cst_43 = arith.constant 0.000000e+00 : f32
      %117 = vector.broadcast %cst_43 : f32 to vector<8x128xf32>
      %118 = arith.select %116, %109, %117 : vector<8x128xi1>, vector<8x128xf32>
      %cst_44 = arith.constant dense<0.000000e+00> : vector<8xf32>
      %119 = vector.multi_reduction <add>, %118, %cst_44 [1] : vector<8x128xf32> to vector<8xf32>
      %120 = vector.shape_cast %119 : vector<8xf32> to vector<8x1xf32>
      %121 = math.log %112 : vector<8x1xf32>
      %122 = arith.subf %121, %120 : vector<8x1xf32>
      %123 = vector.shape_cast %122 : vector<8x1xf32> to vector<1x8x1xf32>
      %cst_45 = arith.constant dense<0.000000e+00> : vector<1xf32>
      %124 = vector.multi_reduction <add>, %123, %cst_45 [1, 2] : vector<1x8x1xf32> to vector<1xf32>
      %125 = vector.shape_cast %124 : vector<1xf32> to vector<1x1x1xf32>
      %126 = vector.extract %125[0, 0, 0] : f32 from vector<1x1x1xf32>
      %127 = vector.broadcast %126 : f32 to vector<1x1xf32>
      %cst_46 = arith.constant 1.250000e-01 : f32
      %128 = vector.broadcast %cst_46 : f32 to vector<1x1xf32>
      %129 = arith.mulf %127, %128 : vector<1x1xf32>
      %cst_47 = arith.constant 3.750000e-01 : f32
      %130 = vector.broadcast %cst_47 : f32 to vector<1x1xf32>
      %131 = arith.addf %98, %130 : vector<1x1xf32>
      %132 = vector.broadcast %cst_32 : f32 to vector<1x1xf32>
      %133 = arith.mulf %132, %131 : vector<1x1xf32>
      %134 = arith.addf %129, %133 : vector<1x1xf32>
      %c0_48 = arith.constant 0 : index
      %c0_49 = arith.constant 0 : index
      %135 = vector.load %arg6[%c0_48, %c0_49] : memref<1x1xf32, #tpu.memory_space<vmem>>, vector<1x1xf32>
      tpu.vector_store %arg6[%c0_48, %c0_49], %134 {strides = array<i32>} : memref<1x1xf32, #tpu.memory_space<vmem>>, vector<1x1xf32>,
    } else {
    }
    %c0_i32_34 = arith.constant 0 : i32
    %102 = arith.cmpi sgt, %arg0, %c0_i32_34 : i32
    %103 = arith.extui %102 : i1 to i32
    %cst_35 = arith.constant 9.99999974E-5 : f32
    %c0_i32_36 = arith.constant 0 : i32
    %104 = arith.cmpi ne, %103, %c0_i32_36 : i32
    scf.if %104 {
      %105 = vector.broadcast %cst_35 : f32 to vector<1x1xf32>
      %106 = arith.mulf %105, %98 : vector<1x1xf32>
      %c0_37 = arith.constant 0 : index
      %c0_38 = arith.constant 0 : index
      %107 = vector.load %arg6[%c0_37, %c0_38] : memref<1x1xf32, #tpu.memory_space<vmem>>, vector<1x1xf32>
      tpu.vector_store %arg6[%c0_37, %c0_38], %106 {strides = array<i32>} : memref<1x1xf32, #tpu.memory_space<vmem>>, vector<1x1xf32>,
    } else {
    }
    return
  }
  func.func @transform_0(%arg0: i32, %arg1: memref<2xi32, #tpu.memory_space<smem>>) -> (i32, i32) {
    %c0_i32 = arith.constant 0 : i32
    %c0_i32_0 = arith.constant 0 : i32
    %c0_i32_1 = arith.constant 0 : i32
    return %c0_i32, %c0_i32_0 : i32, i32
  }
  func.func @transform_1(%arg0: i32, %arg1: memref<2xi32, #tpu.memory_space<smem>>) -> (i32, i32) {
    %c0_i32 = arith.constant 0 : i32
    %c0_i32_0 = arith.constant 0 : i32
    %c0_i32_1 = arith.constant 0 : i32
    return %c0_i32, %c0_i32_0 : i32, i32
  }
  func.func @transform_2(%arg0: i32, %arg1: memref<2xi32, #tpu.memory_space<smem>>) -> (i32, i32, i32) {
    %c0_i32 = arith.constant 0 : i32
    %c0_i32_0 = arith.constant 0 : i32
    %c0_i32_1 = arith.constant 0 : i32
    return %arg0, %c0_i32, %c0_i32_0 : i32, i32, i32
  }
  func.func @transform_3(%arg0: i32, %arg1: memref<2xi32, #tpu.memory_space<smem>>) -> (i32, i32, i32) {
    %c0_i32 = arith.constant 0 : i32
    %c0_i32_0 = arith.constant 0 : i32
    %c0_i32_1 = arith.constant 0 : i32
    return %arg0, %c0_i32, %c0_i32_0 : i32, i32, i32
  }
  func.func @transform_4(%arg0: i32, %arg1: memref<2xi32, #tpu.memory_space<smem>>) -> (i32, i32) {
    %c0_i32 = arith.constant 0 : i32
    %c0_i32_0 = arith.constant 0 : i32
    return %arg0, %c0_i32 : i32, i32
  }
}

</mosaic_0001>

<llo_original>
// kernel: tpu_custom_call.1
$region0: #{tpu_custom_call.1}
  #allocation0 [shape = 'u32[]', space=smem, size = 0x4, offset = 0x4, fixed_abs, tag = 'smem constant byte address 0x4 - core index']
  #allocation1 [shape = 'u32[144,128]{1,0:T(1,128)}', space=vmem, size = 0x12000, scoped, tag = 'internal scratch']
  #allocation2 [shape = 's32[1]{0}', space=sflag, size = 0x4, scoped, tag = 'scoped memory for tpu_custom_call.1']
  #allocation3 [shape = 'u8[512]{0}', space=smem, size = 0x200, scoped, tag = 'prefetched SMEM operand 0']
  %s0 = inlined_call_operand.vmem [shape: s32[2], index: 0, kind: input, shape index: {}]
  %s1 = inlined_call_operand.vmem [shape: f32[8,128], index: 1, kind: input, shape index: {}]
  %s2 = inlined_call_operand.vmem [shape: s32[8,1], index: 2, kind: input, shape index: {}]
  %s3 = inlined_call_operand.hbm [shape: f32[2,16,128], index: 3, kind: input, shape index: {}]
  %s4 = inlined_call_operand.hbm [shape: f32[2,16,128], index: 4, kind: input, shape index: {}]
  %s5 = inlined_call_operand.hbm [shape: f32[1,1], index: 5, kind: output, shape index: {}]
  %s6 = sld [smem:[#allocation0]]
  $region42: #{tpu_custom_call.1} parent=0
    _
  %s8 = ssub.s32 1, %s6
  %s9 = scalar_select 0, %s8, %s6
  %s10 = sshll.u32 %s0, 4
  %s11 = int_to_ptr.vmem [resolvable:$true] %s10
  %13 = dma.vmem_to_smem %s11, 16, [#allocation3], [#allocation2]
  %14 = dma.done [#allocation2], 16
  %15 = sfence
  $region1: #{tpu_custom_call.1} parent=0
    #allocation4 [shape = 'u8[16384]{0}', space=vmem, size = 0x4000, scoped, tag = 'input window, operand 3, single buffered']
    #allocation5 [shape = 's32[1]{0}', space=sflag, size = 0x4, scoped, tag = 'scoped memory for tpu_custom_call.1']
    #allocation6 [shape = 's32[1]{0}', space=sflag, size = 0x4, scoped, tag = 'scoped memory for tpu_custom_call.1']
    #allocation7 [shape = 'u8[16384]{0}', space=vmem, size = 0x4000, scoped, tag = 'input window, operand 4, single buffered']
    #allocation8 [shape = 's32[1]{0}', space=sflag, size = 0x4, scoped, tag = 'scoped memory for tpu_custom_call.1']
    #allocation9 [shape = 'u8[512]{0}', space=vmem, size = 0x400, scoped, tag = 'output window, operand 0, single buffered']
    %16 = vsyncpa [#allocation5], 0
    %17 = vsyncpa [#allocation8], 0
    %18 = vsyncpa [#allocation6], 0
    // Predicated region
    $region2: #{tpu_custom_call.1} parent=1 // pred_check
      _
    $region3: #{tpu_custom_call.1} parent=1 // pred_check_branch
      %20 = sbr.rel (0) target = $region5
    $region4: #{tpu_custom_call.1} parent=1 // pred_region
      _
    $region5: #{tpu_custom_call.1} parent=1 // pred_fallthru
      _
    // Predicated region
    $region6: #{tpu_custom_call.1} parent=1 // pred_check
      _
    $region7: #{tpu_custom_call.1} parent=1 // pred_check_branch
      %22 = sbr.rel (0) target = $region9
    $region8: #{tpu_custom_call.1} parent=1 // pred_region
      _
    $region9: #{tpu_custom_call.1} parent=1 // pred_fallthru
      _
    // Predicated region
    $region10: #{tpu_custom_call.1} parent=1 // pred_check
      _
    $region11: #{tpu_custom_call.1} parent=1 // pred_check_branch
      %24 = sbr.rel (0) target = $region13
    $region12: #{tpu_custom_call.1} parent=1 // pred_region
      %s26 = ssub.s32 512, 512
      %27 = vsyncadd [#allocation5], %s26
      %s28 = sshll.u32 [#allocation4], 4
      %s29 = int_to_ptr.vmem [resolvable:$true] %s28
      %34 = dma.hbm_to_vmem [thread:$0]  %s3, 512, %s29, [#allocation5], 128, 128, 8
    $region13: #{tpu_custom_call.1} parent=1 // pred_fallthru
      _
    // Predicated region
    $region14: #{tpu_custom_call.1} parent=1 // pred_check
      _
    $region15: #{tpu_custom_call.1} parent=1 // pred_check_branch
      %36 = sbr.rel (0) target = $region17
    $region16: #{tpu_custom_call.1} parent=1 // pred_region
      %s38 = ssub.s32 512, 512
      %39 = vsyncadd [#allocation8], %s38
      %s40 = sshll.u32 [#allocation7], 4
      %s41 = int_to_ptr.vmem [resolvable:$true] %s40
      %46 = dma.hbm_to_vmem [thread:$0]  %s4, 512, %s41, [#allocation8], 128, 128, 8
    $region17: #{tpu_custom_call.1} parent=1 // pred_fallthru
      _
    // Predicated region
    $region18: #{tpu_custom_call.1} parent=1 // pred_check
      _
    $region19: #{tpu_custom_call.1} parent=1 // pred_check_branch
      %48 = sbr.rel (0) target = $region21
    $region20: #{tpu_custom_call.1} parent=1 // pred_region
      %49 = dma.done [#allocation5], 512
    $region21: #{tpu_custom_call.1} parent=1 // pred_fallthru
      _
    // Predicated region
    $region22: #{tpu_custom_call.1} parent=1 // pred_check
      _
    $region23: #{tpu_custom_call.1} parent=1 // pred_check_branch
      %51 = sbr.rel (0) target = $region25
    $region24: #{tpu_custom_call.1} parent=1 // pred_region
      %52 = dma.done [#allocation8], 512
    $region25: #{tpu_custom_call.1} parent=1 // pred_fallthru
      _
    %v53 = vlaneseq
    %v54 = vshrl.u32 %v53, 7
    %v55 = vadd.s32 %v54, 8
    %v56 = vlaneseq
    %v57 = vand.u32 %v56, 127
    %vm58 = vcmp.eq.s32.totalorder %v54, %v57
    %vm59 = vcmp.eq.s32.totalorder %v55, %v57
    %v60 = vsel %vm58, 1.0, 0.0
    %v61 = vsel %vm59, 1.0, 0.0
    %v62 = vld [vmem:[#allocation4] sm:$0xff]
    %v63 = vld [vmem:[#allocation4 + $0x8] sm:$0xff]
    %v64 = vld [vmem:[#allocation7] sm:$0xff]
    %v65 = vld [vmem:[#allocation7 + $0x8] sm:$0xff]
    %66 = vmatprep.subr.mxu0 0.0
    %67 = vmatpush1.xpose.msra.mxu0 %v62
    %68 = vmatprep.subr.mxu0 0.0
    %69 = vmatpush1.xpose.msra.mxu0 %v63
    %70 = vmatprep.subr.mxu0 0.0
    %71 = vmatpush1.xpose.msra.mxu0 0.0
    %72 = vmatprep.subr.mxu0 0.0
    %73 = vmatpush1.xpose.msra.mxu0 0.0
    %74 = vmatprep.subr.mxu0 0.0
    %75 = vmatpush1.xpose.msra.mxu0 0.0
    %76 = vmatprep.subr.mxu0 0.0
    %77 = vmatpush1.xpose.msra.mxu0 0.0
    %78 = vmatprep.subr.mxu0 0.0
    %79 = vmatpush1.xpose.msra.mxu0 0.0
    %80 = vmatprep.subr.mxu0 0.0
    %81 = vmatpush1.xpose.msra.mxu0 0.0
    %82 = vmatprep.subr.mxu0 0.0
    %83 = vmatpush1.xpose.msra.mxu0 0.0
    %84 = vmatprep.subr.mxu0 0.0
    %85 = vmatpush1.xpose.msra.mxu0 0.0
    %86 = vmatprep.subr.mxu0 0.0
    %87 = vmatpush1.xpose.msra.mxu0 0.0
    %88 = vmatprep.subr.mxu0 0.0
    %89 = vmatpush1.xpose.msra.mxu0 0.0
    %90 = vmatprep.subr.mxu0 0.0
    %91 = vmatpush1.xpose.msra.mxu0 0.0
    %92 = vmatprep.subr.mxu0 0.0
    %93 = vmatpush1.xpose.msra.mxu0 0.0
    %94 = vmatprep.subr.mxu0 0.0
    %95 = vmatpush1.xpose.msra.mxu0 0.0
    %96 = vmatprep.subr.mxu0 0.0
    %97 = vmatpush1.xpose.msra.mxu0 0.0
    %98 = vmatprep.subr.mxu0 0.0
    %99 = vmatpush1.xpose.msra.mxu0 0.0
    %100 = vmatprep.subr.mxu0 0.0
    %101 = vmatpush1.xpose.msra.mxu0 0.0
    %102 = vmatprep.subr.mxu0 0.0
    %103 = vmatpush1.xpose.msra.mxu0 0.0
    %104 = vmatprep.subr.mxu0 0.0
    %105 = vmatpush1.xpose.msra.mxu0 0.0
    %106 = vmatprep.subr.mxu0 0.0
    %107 = vmatpush1.xpose.msra.mxu0 0.0
    %108 = vmatprep.subr.mxu0 0.0
    %109 = vmatpush1.xpose.msra.mxu0 0.0
    %110 = vmatprep.subr.mxu0 0.0
    %111 = vmatpush1.xpose.msra.mxu0 0.0
    %112 = vmatprep.subr.mxu0 0.0
    %113 = vmatpush1.xpose.msra.mxu0 0.0
    %114 = vmatprep.subr.mxu0 0.0
    %115 = vmatpush1.xpose.msra.mxu0 0.0
    %116 = vmatprep.subr.mxu0 0.0
    %117 = vmatpush1.xpose.msra.mxu0 0.0
    %118 = vmatprep.subr.mxu0 0.0
    %119 = vmatpush1.xpose.msra.mxu0 0.0
    %120 = vmatprep.subr.mxu0 0.0
    %121 = vmatpush1.xpose.msra.mxu0 0.0
    %122 = vmatprep.subr.mxu0 0.0
    %123 = vmatpush1.xpose.msra.mxu0 0.0
    %124 = vmatprep.subr.mxu0 0.0
    %125 = vmatpush1.xpose.msra.mxu0 0.0
    %126 = vmatprep.subr.mxu0 0.0
    %127 = vmatpush1.xpose.msra.mxu0 0.0
    %128 = vmatprep.subr.mxu0 0.0
    %129 = vmatpush1.xpose.msra.mxu0 0.0
    %130 = vmatprep.mubr.f32.mxu0 0.0
    %131 = vmatmul.mubr.f32.gmra.mrb[0].mxu0 %v62
    %v132 = vpop.f32.mrb[0].mxu0
    %v133 = vadd.f32 0.0, %v132
    %v134 = vpop.f32.mrb[0].mxu0
    %135 = vmatprep.mubr.f32.mxu0 0.0
    %136 = vmatmul.mubr.f32.gmra.mrb[0].mxu0 %v63
    %v137 = vpop.f32.mrb[0].mxu0
    %v138 = vadd.f32 0.0, %v137
    %v139 = vpop.f32.mrb[0].mxu0
    %140 = vdwg.mxu0
    %141 = vmatprep.subr.mxu0 0.0
    %142 = vmatpush1.xpose.msra.mxu0 %v64
    %143 = vmatprep.subr.mxu0 0.0
    %144 = vmatpush1.xpose.msra.mxu0 %v65
    %145 = vmatprep.subr.mxu0 0.0
    %146 = vmatpush1.xpose.msra.mxu0 0.0
    %147 = vmatprep.subr.mxu0 0.0
    %148 = vmatpush1.xpose.msra.mxu0 0.0
    %149 = vmatprep.subr.mxu0 0.0
    %150 = vmatpush1.xpose.msra.mxu0 0.0
    %151 = vmatprep.subr.mxu0 0.0
    %152 = vmatpush1.xpose.msra.mxu0 0.0
    %153 = vmatprep.subr.mxu0 0.0
    %154 = vmatpush1.xpose.msra.mxu0 0.0
    %155 = vmatprep.subr.mxu0 0.0
    %156 = vmatpush1.xpose.msra.mxu0 0.0
    %157 = vmatprep.subr.mxu0 0.0
    %158 = vmatpush1.xpose.msra.mxu0 0.0
    %159 = vmatprep.subr.mxu0 0.0
    %160 = vmatpush1.xpose.msra.mxu0 0.0
    %161 = vmatprep.subr.mxu0 0.0
    %162 = vmatpush1.xpose.msra.mxu0 0.0
    %163 = vmatprep.subr.mxu0 0.0
    %164 = vmatpush1.xpose.msra.mxu0 0.0
    %165 = vmatprep.subr.mxu0 0.0
    %166 = vmatpush1.xpose.msra.mxu0 0.0
    %167 = vmatprep.subr.mxu0 0.0
    %168 = vmatpush1.xpose.msra.mxu0 0.0
    %169 = vmatprep.subr.mxu0 0.0
    %170 = vmatpush1.xpose.msra.mxu0 0.0
    %171 = vmatprep.subr.mxu0 0.0
    %172 = vmatpush1.xpose.msra.mxu0 0.0
    %173 = vmatprep.subr.mxu0 0.0
    %174 = vmatpush1.xpose.msra.mxu0 0.0
    %175 = vmatprep.subr.mxu0 0.0
    %176 = vmatpush1.xpose.msra.mxu0 0.0
    %177 = vmatprep.subr.mxu0 0.0
    %178 = vmatpush1.xpose.msra.mxu0 0.0
    %179 = vmatprep.subr.mxu0 0.0
    %180 = vmatpush1.xpose.msra.mxu0 0.0
    %181 = vmatprep.subr.mxu0 0.0
    %182 = vmatpush1.xpose.msra.mxu0 0.0
    %183 = vmatprep.subr.mxu0 0.0
    %184 = vmatpush1.xpose.msra.mxu0 0.0
    %185 = vmatprep.subr.mxu0 0.0
    %186 = vmatpush1.xpose.msra.mxu0 0.0
    %187 = vmatprep.subr.mxu0 0.0
    %188 = vmatpush1.xpose.msra.mxu0 0.0
    %189 = vmatprep.subr.mxu0 0.0
    %190 = vmatpush1.xpose.msra.mxu0 0.0
    %191 = vmatprep.subr.mxu0 0.0
    %192 = vmatpush1.xpose.msra.mxu0 0.0
    %193 = vmatprep.subr.mxu0 0.0
    %194 = vmatpush1.xpose.msra.mxu0 0.0
    %195 = vmatprep.subr.mxu0 0.0
    %196 = vmatpush1.xpose.msra.mxu0 0.0
    %197 = vmatprep.subr.mxu0 0.0
    %198 = vmatpush1.xpose.msra.mxu0 0.0
    %199 = vmatprep.subr.mxu0 0.0
    %200 = vmatpush1.xpose.msra.mxu0 0.0
    %201 = vmatprep.subr.mxu0 0.0
    %202 = vmatpush1.xpose.msra.mxu0 0.0
    %203 = vmatprep.subr.mxu0 0.0
    %204 = vmatpush1.xpose.msra.mxu0 0.0
    %205 = vmatprep.mubr.f32.mxu0 0.0
    %206 = vmatmul.mubr.f32.gmra.mrb[0].mxu0 %v64
    %v207 = vpop.f32.mrb[0].mxu0
    %v208 = vadd.f32 0.0, %v207
    %v209 = vpop.f32.mrb[0].mxu0
    %210 = vmatprep.mubr.f32.mxu0 0.0
    %211 = vmatmul.mubr.f32.gmra.mrb[0].mxu0 %v65
    %v212 = vpop.f32.mrb[0].mxu0
    %v213 = vadd.f32 0.0, %v212
    %v214 = vpop.f32.mrb[0].mxu0
    %215 = vdwg.mxu0
    %v216 = vmul.f32 %v133, %v133
    %v217 = vmul.f32 %v138, %v138
    %vm218 = vcmask 130048
    %v219 = vsel %vm218, %v216, 0.0
    %v220 = vsel %vm218, %v217, 0.0
    %v221 = vadd.f32 %v219, %v220
    %222 = vadd.xlane.f32.xlu0 %v221
    %v223 = vpop.xlane.xlu0 %222
    %v224 = vrot.slane %v223, 4
    %v225 = vadd.f32 %v223, %v224
    %v226 = vrot.slane %v225, 2
    %v227 = vadd.f32 %v225, %v226
    %v228 = vrot.slane %v227, 1
    %v229 = vadd.f32 %v227, %v228
    %s230 = vtos %v229
    %v231 = vstv %s230
    %v232 = vmul.f32 %v208, %v208
    %v233 = vmul.f32 %v213, %v213
    %v234 = vsel %vm218, %v232, 0.0
    %v235 = vsel %vm218, %v233, 0.0
    %v236 = vadd.f32 %v234, %v235
    %237 = vadd.xlane.f32.xlu0 %v236
    %v238 = vpop.xlane.xlu0 %237
    %v239 = vrot.slane %v238, 4
    %v240 = vadd.f32 %v238, %v239
    %v241 = vrot.slane %v240, 2
    %v242 = vadd.f32 %v240, %v241
    %v243 = vrot.slane %v242, 1
    %v244 = vadd.f32 %v242, %v243
    %s245 = vtos %v244
    %v246 = vstv %s245
    %v247 = vadd.f32 %v231, %v246
    %v248 = vmul.f32 %v133, %v60
    %v249 = vmul.f32 %v138, %v61
    %v250 = vsel %vm218, %v248, 0.0
    %v251 = vsel %vm218, %v249, 0.0
    %v252 = vadd.f32 %v250, %v251
    %253 = vadd.xlane.f32.xlu0 %v252
    %v254 = vpop.xlane.xlu0 %253
    %v255 = vrot.slane %v254, 4
    %v256 = vadd.f32 %v254, %v255
    %v257 = vrot.slane %v256, 2
    %v258 = vadd.f32 %v256, %v257
    %v259 = vrot.slane %v258, 1
    %v260 = vadd.f32 %v258, %v259
    %s261 = vtos %v260
    %v262 = vstv %s261
    %v263 = vmul.f32 %v208, %v60
    %v264 = vmul.f32 %v213, %v61
    %v265 = vsel %vm218, %v263, 0.0
    %v266 = vsel %vm218, %v264, 0.0
    %v267 = vadd.f32 %v265, %v266
    %268 = vadd.xlane.f32.xlu0 %v267
    %v269 = vpop.xlane.xlu0 %268
    %v270 = vrot.slane %v269, 4
    %v271 = vadd.f32 %v269, %v270
    %v272 = vrot.slane %v271, 2
    %v273 = vadd.f32 %v271, %v272
    %v274 = vrot.slane %v273, 1
    %v275 = vadd.f32 %v273, %v274
    %s276 = vtos %v275
    %v277 = vstv %s276
    %v278 = vadd.f32 %v262, %v277
    %s279 = smul.u32 0, 2
    %s280 = sld [smem:[#allocation3 + %s279]]
    %p281 = scmp.gt.s32.totalorder %s280, 1
    %s282 = scalar_select %p281, %s280, 1
    %s283 = scvt.s32.f32 %s282
    %s284 = smul.f32 %s283, %s283
    %v285 = vstv %s284
    %v286 = vrcp.pop %v285
    %s287 = vtos %v286
    %v288 = vmul.f32 %v278, 2.0
    %v289 = vsub.f32 %v247, %v288
    %v290 = vstv %s287
    %v291 = vmul.f32 %v290, %v289
    %v292 = vadd.f32 %v291, 0.0
    %s293 = scalar_lea.vmem [#allocation4], 16
    %v294 = vld [vmem:[%s293] sm:$0xff]
    %v295 = vld [vmem:[%s293 + $0x8] sm:$0xff]
    %s296 = scalar_lea.vmem [#allocation7], 16
    %v297 = vld [vmem:[%s296] sm:$0xff]
    %v298 = vld [vmem:[%s296 + $0x8] sm:$0xff]
    %299 = vmatprep.subr.mxu0 0.0
    %300 = vmatpush1.xpose.msra.mxu0 %v294
    %301 = vmatprep.subr.mxu0 0.0
    %302 = vmatpush1.xpose.msra.mxu0 %v295
    %303 = vmatprep.subr.mxu0 0.0
    %304 = vmatpush1.xpose.msra.mxu0 0.0
    %305 = vmatprep.subr.mxu0 0.0
    %306 = vmatpush1.xpose.msra.mxu0 0.0
    %307 = vmatprep.subr.mxu0 0.0
    %308 = vmatpush1.xpose.msra.mxu0 0.0
    %309 = vmatprep.subr.mxu0 0.0
    %310 = vmatpush1.xpose.msra.mxu0 0.0
    %311 = vmatprep.subr.mxu0 0.0
    %312 = vmatpush1.xpose.msra.mxu0 0.0
    %313 = vmatprep.subr.mxu0 0.0
    %314 = vmatpush1.xpose.msra.mxu0 0.0
    %315 = vmatprep.subr.mxu0 0.0
    %316 = vmatpush1.xpose.msra.mxu0 0.0
    %317 = vmatprep.subr.mxu0 0.0
    %318 = vmatpush1.xpose.msra.mxu0 0.0
    %319 = vmatprep.subr.mxu0 0.0
    %320 = vmatpush1.xpose.msra.mxu0 0.0
    %321 = vmatprep.subr.mxu0 0.0
    %322 = vmatpush1.xpose.msra.mxu0 0.0
    %323 = vmatprep.subr.mxu0 0.0
    %324 = vmatpush1.xpose.msra.mxu0 0.0
    %325 = vmatprep.subr.mxu0 0.0
    %326 = vmatpush1.xpose.msra.mxu0 0.0
    %327 = vmatprep.subr.mxu0 0.0
    %328 = vmatpush1.xpose.msra.mxu0 0.0
    %329 = vmatprep.subr.mxu0 0.0
    %330 = vmatpush1.xpose.msra.mxu0 0.0
    %331 = vmatprep.subr.mxu0 0.0
    %332 = vmatpush1.xpose.msra.mxu0 0.0
    %333 = vmatprep.subr.mxu0 0.0
    %334 = vmatpush1.xpose.msra.mxu0 0.0
    %335 = vmatprep.subr.mxu0 0.0
    %336 = vmatpush1.xpose.msra.mxu0 0.0
    %337 = vmatprep.subr.mxu0 0.0
    %338 = vmatpush1.xpose.msra.mxu0 0.0
    %339 = vmatprep.subr.mxu0 0.0
    %340 = vmatpush1.xpose.msra.mxu0 0.0
    %341 = vmatprep.subr.mxu0 0.0
    %342 = vmatpush1.xpose.msra.mxu0 0.0
    %343 = vmatprep.subr.mxu0 0.0
    %344 = vmatpush1.xpose.msra.mxu0 0.0
    %345 = vmatprep.subr.mxu0 0.0
    %346 = vmatpush1.xpose.msra.mxu0 0.0
    %347 = vmatprep.subr.mxu0 0.0
    %348 = vmatpush1.xpose.msra.mxu0 0.0
    %349 = vmatprep.subr.mxu0 0.0
    %350 = vmatpush1.xpose.msra.mxu0 0.0
    %351 = vmatprep.subr.mxu0 0.0
    %352 = vmatpush1.xpose.msra.mxu0 0.0
    %353 = vmatprep.subr.mxu0 0.0
    %354 = vmatpush1.xpose.msra.mxu0 0.0
    %355 = vmatprep.subr.mxu0 0.0
    %356 = vmatpush1.xpose.msra.mxu0 0.0
    %357 = vmatprep.subr.mxu0 0.0
    %358 = vmatpush1.xpose.msra.mxu0 0.0
    %359 = vmatprep.subr.mxu0 0.0
    %360 = vmatpush1.xpose.msra.mxu0 0.0
    %361 = vmatprep.subr.mxu0 0.0
    %362 = vmatpush1.xpose.msra.mxu0 0.0
    %363 = vmatprep.mubr.f32.mxu0 0.0
    %364 = vmatmul.mubr.f32.gmra.mrb[0].mxu0 %v294
    %v365 = vpop.f32.mrb[0].mxu0
    %v366 = vadd.f32 0.0, %v365
    %v367 = vpop.f32.mrb[0].mxu0
    %368 = vmatprep.mubr.f32.mxu0 0.0
    %369 = vmatmul.mubr.f32.gmra.mrb[0].mxu0 %v295
    %v370 = vpop.f32.mrb[0].mxu0
    %v371 = vadd.f32 0.0, %v370
    %v372 = vpop.f32.mrb[0].mxu0
    %373 = vdwg.mxu0
    %374 = vmatprep.subr.mxu0 0.0
    %375 = vmatpush1.xpose.msra.mxu0 %v297
    %376 = vmatprep.subr.mxu0 0.0
    %377 = vmatpush1.xpose.msra.mxu0 %v298
    %378 = vmatprep.subr.mxu0 0.0
    %379 = vmatpush1.xpose.msra.mxu0 0.0
    %380 = vmatprep.subr.mxu0 0.0
    %381 = vmatpush1.xpose.msra.mxu0 0.0
    %382 = vmatprep.subr.mxu0 0.0
    %383 = vmatpush1.xpose.msra.mxu0 0.0
    %384 = vmatprep.subr.mxu0 0.0
    %385 = vmatpush1.xpose.msra.mxu0 0.0
    %386 = vmatprep.subr.mxu0 0.0
    %387 = vmatpush1.xpose.msra.mxu0 0.0
    %388 = vmatprep.subr.mxu0 0.0
    %389 = vmatpush1.xpose.msra.mxu0 0.0
    %390 = vmatprep.subr.mxu0 0.0
    %391 = vmatpush1.xpose.msra.mxu0 0.0
    %392 = vmatprep.subr.mxu0 0.0
    %393 = vmatpush1.xpose.msra.mxu0 0.0
    %394 = vmatprep.subr.mxu0 0.0
    %395 = vmatpush1.xpose.msra.mxu0 0.0
    %396 = vmatprep.subr.mxu0 0.0
    %397 = vmatpush1.xpose.msra.mxu0 0.0
    %398 = vmatprep.subr.mxu0 0.0
    %399 = vmatpush1.xpose.msra.mxu0 0.0
    %400 = vmatprep.subr.mxu0 0.0
    %401 = vmatpush1.xpose.msra.mxu0 0.0
    %402 = vmatprep.subr.mxu0 0.0
    %403 = vmatpush1.xpose.msra.mxu0 0.0
    %404 = vmatprep.subr.mxu0 0.0
    %405 = vmatpush1.xpose.msra.mxu0 0.0
    %406 = vmatprep.subr.mxu0 0.0
    %407 = vmatpush1.xpose.msra.mxu0 0.0
    %408 = vmatprep.subr.mxu0 0.0
    %409 = vmatpush1.xpose.msra.mxu0 0.0
    %410 = vmatprep.subr.mxu0 0.0
    %411 = vmatpush1.xpose.msra.mxu0 0.0
    %412 = vmatprep.subr.mxu0 0.0
    %413 = vmatpush1.xpose.msra.mxu0 0.0
    %414 = vmatprep.subr.mxu0 0.0
    %415 = vmatpush1.xpose.msra.mxu0 0.0
    %416 = vmatprep.subr.mxu0 0.0
    %417 = vmatpush1.xpose.msra.mxu0 0.0
    %418 = vmatprep.subr.mxu0 0.0
    %419 = vmatpush1.xpose.msra.mxu0 0.0
    %420 = vmatprep.subr.mxu0 0.0
    %421 = vmatpush1.xpose.msra.mxu0 0.0
    %422 = vmatprep.subr.mxu0 0.0
    %423 = vmatpush1.xpose.msra.mxu0 0.0
    %424 = vmatprep.subr.mxu0 0.0
    %425 = vmatpush1.xpose.msra.mxu0 0.0
    %426 = vmatprep.subr.mxu0 0.0
    %427 = vmatpush1.xpose.msra.mxu0 0.0
    %428 = vmatprep.subr.mxu0 0.0
    %429 = vmatpush1.xpose.msra.mxu0 0.0
    %430 = vmatprep.subr.mxu0 0.0
    %431 = vmatpush1.xpose.msra.mxu0 0.0
    %432 = vmatprep.subr.mxu0 0.0
    %433 = vmatpush1.xpose.msra.mxu0 0.0
    %434 = vmatprep.subr.mxu0 0.0
    %435 = vmatpush1.xpose.msra.mxu0 0.0
    %436 = vmatprep.subr.mxu0 0.0
    %437 = vmatpush1.xpose.msra.mxu0 0.0
    %438 = vmatprep.mubr.f32.mxu0 0.0
    %439 = vmatmul.mubr.f32.gmra.mrb[0].mxu0 %v297
    %v440 = vpop.f32.mrb[0].mxu0
    %v441 = vadd.f32 0.0, %v440
    %v442 = vpop.f32.mrb[0].mxu0
    %443 = vmatprep.mubr.f32.mxu0 0.0
    %444 = vmatmul.mubr.f32.gmra.mrb[0].mxu0 %v298
    %v445 = vpop.f32.mrb[0].mxu0
    %v446 = vadd.f32 0.0, %v445
    %v447 = vpop.f32.mrb[0].mxu0
    %448 = vdwg.mxu0
    %v449 = vmul.f32 %v366, %v366
    %v450 = vmul.f32 %v371, %v371
    %v451 = vsel %vm218, %v449, 0.0
    %v452 = vsel %vm218, %v450, 0.0
    %v453 = vadd.f32 %v451, %v452
    %454 = vadd.xlane.f32.xlu0 %v453
    %v455 = vpop.xlane.xlu0 %454
    %v456 = vrot.slane %v455, 4
    %v457 = vadd.f32 %v455, %v456
    %v458 = vrot.slane %v457, 2
    %v459 = vadd.f32 %v457, %v458
    %v460 = vrot.slane %v459, 1
    %v461 = vadd.f32 %v459, %v460
    %s462 = vtos %v461
    %v463 = vstv %s462
    %v464 = vmul.f32 %v441, %v441
    %v465 = vmul.f32 %v446, %v446
    %v466 = vsel %vm218, %v464, 0.0
    %v467 = vsel %vm218, %v465, 0.0
    %v468 = vadd.f32 %v466, %v467
    %469 = vadd.xlane.f32.xlu0 %v468
    %v470 = vpop.xlane.xlu0 %469
    %v471 = vrot.slane %v470, 4
    %v472 = vadd.f32 %v470, %v471
    %v473 = vrot.slane %v472, 2
    %v474 = vadd.f32 %v472, %v473
    %v475 = vrot.slane %v474, 1
    %v476 = vadd.f32 %v474, %v475
    %s477 = vtos %v476
    %v478 = vstv %s477
    %v479 = vadd.f32 %v463, %v478
    %v480 = vmul.f32 %v366, %v60
    %v481 = vmul.f32 %v371, %v61
    %v482 = vsel %vm218, %v480, 0.0
    %v483 = vsel %vm218, %v481, 0.0
    %v484 = vadd.f32 %v482, %v483
    %485 = vadd.xlane.f32.xlu0 %v484
    %v486 = vpop.xlane.xlu0 %485
    %v487 = vrot.slane %v486, 4
    %v488 = vadd.f32 %v486, %v487
    %v489 = vrot.slane %v488, 2
    %v490 = vadd.f32 %v488, %v489
    %v491 = vrot.slane %v490, 1
    %v492 = vadd.f32 %v490, %v491
    %s493 = vtos %v492
    %v494 = vstv %s493
    %v495 = vmul.f32 %v441, %v60
    %v496 = vmul.f32 %v446, %v61
    %v497 = vsel %vm218, %v495, 0.0
    %v498 = vsel %vm218, %v496, 0.0
    %v499 = vadd.f32 %v497, %v498
    %500 = vadd.xlane.f32.xlu0 %v499
    %v501 = vpop.xlane.xlu0 %500
    %v502 = vrot.slane %v501, 4
    %v503 = vadd.f32 %v501, %v502
    %v504 = vrot.slane %v503, 2
    %v505 = vadd.f32 %v503, %v504
    %v506 = vrot.slane %v505, 1
    %v507 = vadd.f32 %v505, %v506
    %s508 = vtos %v507
    %v509 = vstv %s508
    %v510 = vadd.f32 %v494, %v509
    %s511 = sadd.s32 %s279, 1
    %s512 = sld [smem:[#allocation3 + %s511]]
    %p513 = scmp.gt.s32.totalorder %s512, 1
    %s514 = scalar_select %p513, %s512, 1
    %s515 = scvt.s32.f32 %s514
    %s516 = smul.f32 %s515, %s515
    %v517 = vstv %s516
    %v518 = vrcp.pop %v517
    %s519 = vtos %v518
    %v520 = vmul.f32 %v510, 2.0
    %v521 = vsub.f32 %v479, %v520
    %v522 = vstv %s519
    %v523 = vmul.f32 %v522, %v521
    %v524 = vadd.f32 %v292, %v523
    %p525 = scmp.eq.s32.totalorder 0, 0
    // Predicated region
    $region26: #{tpu_custom_call.1} parent=1 // pred_check
      %p526 = pneg %p525
    $region27: #{tpu_custom_call.1} parent=1 // pred_check_branch
      %528 = sbr.rel (%p526) target = $region29
    $region28: #{tpu_custom_call.1} parent=1 // pred_region
      %v529 = vld [vmem:[%s1] sm:$0xff]
      %530 = vmax.xlane.f32.xlu0 %v529
      %v531 = vpop.xlane.xlu0 %530
      %v532 = vsub.f32 %v529, %v531
      %v533 = vmul.f32 %v532, 1.442695
      %v534 = vpow.pop %v533
      %535 = vadd.xlane.f32.xlu0 %v534
      %v536 = vpop.xlane.xlu0 %535
      %v537 = vld [vmem:[%s2] sm:$0xff]
      %538 = vset.pattern.permute.xlu0 0
      %539 = vperm.xlu0 %538, %v537
      %v540 = vpop.permute.xlu0 %539
      %vm541 = vcmp.eq.s32.totalorder %v57, %v540
      %v542 = vsel %vm541, %v532, 0.0
      %543 = vadd.xlane.f32.xlu0 %v542
      %v544 = vpop.xlane.xlu0 %543
      %v545 = vlog2.pop %v536
      %v546 = vmul.f32 %v545, 0.6931472
      %v547 = vsub.f32 %v546, %v544
      %vm548 = vcmask 7168
      %v549 = vsel %vm548, %v547, 0.0
      %550 = vadd.xlane.f32.xlu0 %v549
      %v551 = vpop.xlane.xlu0 %550
      %v552 = vrot.slane %v551, 4
      %v553 = vadd.f32 %v551, %v552
      %v554 = vrot.slane %v553, 2
      %v555 = vadd.f32 %v553, %v554
      %v556 = vrot.slane %v555, 1
      %v557 = vadd.f32 %v555, %v556
      %s558 = vtos %v557
      %v559 = vstv %s558
      %v560 = vmul.f32 %v559, 0.125
      %v561 = vadd.f32 %v524, 0.375
      %v562 = vmul.f32 %v561, 0.0001
      %v563 = vadd.f32 %v560, %v562
      %vm564 = vcmask 0
      %565 = vst.msk [vmem:[#allocation9] sm:$0x1] %vm564, %v563
    $region29: #{tpu_custom_call.1} parent=1 // pred_fallthru
      _
    %p566 = scmp.gt.s32.totalorder 0, 0
    // Predicated region
    $region30: #{tpu_custom_call.1} parent=1 // pred_check
      %p567 = pneg %p566
    $region31: #{tpu_custom_call.1} parent=1 // pred_check_branch
      %569 = sbr.rel (%p567) target = $region33
    $region32: #{tpu_custom_call.1} parent=1 // pred_region
      %v570 = vmul.f32 %v524, 0.0001
      %vm571 = vcmask 0
      %572 = vst.msk [vmem:[#allocation9] sm:$0x1] %vm571, %v570
    $region33: #{tpu_custom_call.1} parent=1 // pred_fallthru
      _
    // Predicated region
    $region34: #{tpu_custom_call.1} parent=1 // pred_check
      _
    $region35: #{tpu_custom_call.1} parent=1 // pred_check_branch
      %574 = sbr.rel (0) target = $region37
    $region36: #{tpu_custom_call.1} parent=1 // pred_region
      %s576 = ssub.s32 16, 16
      %577 = vsyncadd [#allocation6], %s576
      %s579 = sshll.u32 [#allocation9], 4
      %s580 = int_to_ptr.vmem [resolvable:$true] %s579
      %582 = dma.vmem_to_hbm [thread:$0]  %s580, 16, %s5, [#allocation6]
    $region37: #{tpu_custom_call.1} parent=1 // pred_fallthru
      _
    // Predicated region
    $region38: #{tpu_custom_call.1} parent=1 // pred_check
      _
    $region39: #{tpu_custom_call.1} parent=1 // pred_check_branch
      %584 = sbr.rel (0) target = $region41
    $region40: #{tpu_custom_call.1} parent=1 // pred_region
      %585 = dma.done [#allocation6], 16
    $region41: #{tpu_custom_call.1} parent=1 // pred_fallthru
      _
    %586 = vsyncpa [#allocation5], 1
    %587 = vsyncpa [#allocation8], 1
    %588 = vsyncpa [#allocation6], 1

</llo_original>
